<compile_context>
chip_gen: v7x
topology: tpu7x:2x2x1
jax: 0.10.0
libtpu: 0.0.40
codegen_flags: <defaults>
</compile_context>

<pallas_src>
import jax
import jax.numpy as jnp
from jax.experimental import pallas as pl
from jax.experimental.pallas import tpu as pltpu


def _round_up(n: int, m: int) -> int:
    return ((n + m - 1) // m) * m


def _linear_kernel(x_ref, w_ref, b_ref, o_ref):
    # x_ref: (TB, 16) VMEM -- natural layout, contiguous HBM DMA per block
    # w_ref: (16, 1)  VMEM -- weight column (constant index_map, fetched once)
    # b_ref: (1,)     SMEM -- scalar bias
    # o_ref: (1, TB)  VMEM -- lane-dense output row
    xT = x_ref[...].astype(jnp.float32).T        # (16, TB) in-kernel XLU transpose
    w = w_ref[...].astype(jnp.float32)           # (16, 1) broadcasts over lanes
    # VPU broadcast-multiply + sublane reduce over the 16 features (no MXU).
    y = jnp.sum(xT * w, axis=0, keepdims=True)   # (1, TB) f32
    o_ref[...] = (y + b_ref[0]).astype(o_ref.dtype)


def net_forward(x, weight, bias, *, tb_max: int = 65536, vmem_limit_bytes=None):
    """Net forward: y = x @ weight.T + bias.

    x: (B, 16), weight: (1, 16), bias: (1,)  ->  (B, 1)
    """
    B, in_features = x.shape
    out_features = weight.shape[0]          # == 1 for this module
    assert out_features == 1, "Net's LinearMem has a single output feature"

    w_col = weight.astype(jnp.float32).T    # (16, 1) -- 64 bytes, negligible
    b = bias.astype(jnp.float32)            # (1,)

    # Batch-axis (lane) tile.  B <= 128: one full-array block.  Otherwise a
    # multiple of 128, MB-scale, capped so the grid has >=2 steps (v7x
    # megacore) and the double-buffered block fits every VMEM budget.
    if B <= 128:
        tb = B
    else:
        tb = _round_up(min(tb_max, _round_up(pl.cdiv(B, 2), 128)), 128)
    grid = (pl.cdiv(B, tb),)                # ragged tail handled by Pallas masking

    itemsize = jnp.dtype(x.dtype).itemsize
    cost = pl.CostEstimate(
        flops=2 * B * in_features,
        transcendentals=0,
        bytes_accessed=B * in_features * itemsize      # read x
        + B * itemsize                                  # write y
        + (in_features + 1) * 4,                        # weight + bias
    )

    yT = pl.pallas_call(
        _linear_kernel,
        out_shape=jax.ShapeDtypeStruct((out_features, B), x.dtype),
        grid=grid,
        in_specs=[
            pl.BlockSpec((tb, in_features), lambda i: (i, 0)),
            pl.BlockSpec((in_features, out_features), lambda i: (0, 0)),
            pl.BlockSpec(memory_space=pltpu.MemorySpace.SMEM),
        ],
        out_specs=pl.BlockSpec((out_features, tb), lambda i: (0, i)),
        compiler_params=pltpu.CompilerParams(
            dimension_semantics=("parallel",),
            vmem_limit_bytes=vmem_limit_bytes),
        cost_estimate=cost,
    )(x, w_col, b)

    # Back to the nn.Linear output layout (B, 1): tiny reshape, no HBM pass.
    return yT.reshape(B, out_features)


if __name__ == "__main__":
    key = jax.random.PRNGKey(0)
    kx, kw, kb, kx2, kx3 = jax.random.split(key, 5)

    IN, OUT = 16, 1
    # Deterministic params mimicking nn.Linear's uniform(-1/sqrt(in), 1/sqrt(in)).
    bound = 1.0 / (IN ** 0.5)
    weight = jax.random.uniform(kw, (OUT, IN), minval=-bound, maxval=bound,
                                dtype=jnp.float32)
    bias = jax.random.uniform(kb, (OUT,), minval=-bound, maxval=bound,
                              dtype=jnp.float32)

    # Case 1: tiny batch -> single full-array block, grid=(1,).
    x = jax.random.normal(kx, (8, IN), dtype=jnp.float32)
    y = jax.block_until_ready(net_forward(x, weight, bias))
    assert y.shape == (8, OUT)
    assert jnp.allclose(y, x @ weight.T + bias, atol=1e-5, rtol=1e-5)

    # Case 2: multi-step "parallel" grid, even split (B=256 -> tb=128, grid=(2,)).
    x2 = jax.random.normal(kx2, (256, IN), dtype=jnp.float32)
    y2 = jax.block_until_ready(net_forward(x2, weight, bias))
    assert y2.shape == (256, OUT)
    assert jnp.allclose(y2, x2 @ weight.T + bias, atol=1e-5, rtol=1e-5)

    # Case 3: ragged batch, no host-side padding (B=200 -> tb=128, grid=(2,),
    # partial last block; OOB output lanes masked by Pallas on writeback).
    x3 = jax.random.normal(kx3, (200, IN), dtype=jnp.float32)
    y3 = jax.block_until_ready(net_forward(x3, weight, bias))
    assert y3.shape == (200, OUT)
    assert jnp.allclose(y3, x3 @ weight.T + bias, atol=1e-5, rtol=1e-5)

    print("KERNEL_OK")
</pallas_src>

<mosaic_0001>
module attributes {stable_mosaic.version = 11 : i64} {
  func.func @_linear_kernel(%arg0: i32, %arg1: memref<8x16xf32, #tpu.memory_space<vmem>>, %arg2: memref<16x1xf32, #tpu.memory_space<vmem>>, %arg3: memref<1xf32, #tpu.memory_space<smem>>, %arg4: memref<1x8xf32, #tpu.memory_space<vmem>>) attributes {dimension_semantics = [#tpu.dimension_semantics<parallel>], iteration_bounds = array<i64: 1>, scalar_prefetch = 0 : i64, scratch_operands = 0 : i64, tpu.core_type = #tpu.core_type<tc>, window_params = [{transform_indices = @transform_0, window_bounds = array<i64: 8, 16>}, {pipeline_mode = #tpu.pipeline_mode<synchronous>, transform_indices = @transform_1, window_bounds = array<i64: 16, 1>}, {transform_indices = @transform_2, window_bounds = array<i64: 1>}, {transform_indices = @transform_3, window_bounds = array<i64: 1, 8>}]} {
    %c0 = arith.constant 0 : index
    %c0_0 = arith.constant 0 : index
    %0 = vector.load %arg1[%c0, %c0_0] : memref<8x16xf32, #tpu.memory_space<vmem>>, vector<8x16xf32>
    %1 = tpu.transpose %0, [1, 0] : vector<8x16xf32> -> vector<16x8xf32>
    %c0_1 = arith.constant 0 : index
    %c0_2 = arith.constant 0 : index
    %2 = vector.load %arg2[%c0_1, %c0_2] : memref<16x1xf32, #tpu.memory_space<vmem>>, vector<16x1xf32>
    %3 = vector.broadcast %2 : vector<16x1xf32> to vector<16x8xf32>
    %4 = arith.mulf %1, %3 : vector<16x8xf32>
    %cst = arith.constant dense<0.000000e+00> : vector<8xf32>
    %5 = vector.multi_reduction <add>, %4, %cst [0] : vector<16x8xf32> to vector<8xf32>
    %6 = vector.shape_cast %5 : vector<8xf32> to vector<1x8xf32>
    %c0_3 = arith.constant 0 : index
    %7 = memref.load %arg3[%c0_3] : memref<1xf32, #tpu.memory_space<smem>>
    %8 = vector.broadcast %7 : f32 to vector<1x8xf32>
    %9 = arith.addf %6, %8 : vector<1x8xf32>
    %c0_4 = arith.constant 0 : index
    %c0_5 = arith.constant 0 : index
    %10 = vector.load %arg4[%c0_4, %c0_5] : memref<1x8xf32, #tpu.memory_space<vmem>>, vector<1x8xf32>
    tpu.vector_store %arg4[%c0_4, %c0_5], %9 {strides = array<i32>} : memref<1x8xf32, #tpu.memory_space<vmem>>, vector<1x8xf32>,
    return
  }
  func.func @transform_0(%arg0: i32) -> (i32, i32) {
    %c0_i32 = arith.constant 0 : i32
    %c0_i32_0 = arith.constant 0 : i32
    return %arg0, %c0_i32 : i32, i32
  }
  func.func @transform_1(%arg0: i32) -> (i32, i32) {
    %c0_i32 = arith.constant 0 : i32
    %c0_i32_0 = arith.constant 0 : i32
    %c0_i32_1 = arith.constant 0 : i32
    return %c0_i32, %c0_i32_0 : i32, i32
  }
  func.func @transform_2(%arg0: i32) -> i32 {
    %c0_i32 = arith.constant 0 : i32
    %c0_i32_0 = arith.constant 0 : i32
    return %c0_i32 : i32
  }
  func.func @transform_3(%arg0: i32) -> (i32, i32) {
    %c0_i32 = arith.constant 0 : i32
    %c0_i32_0 = arith.constant 0 : i32
    return %c0_i32, %arg0 : i32, i32
  }
}

</mosaic_0001>

<llo_original>
// kernel: tpu_custom_call.1
$region0: #{tpu_custom_call.1}
  #allocation0 [shape = 'u32[]', space=smem, size = 0x4, offset = 0x4, fixed_abs, tag = 'smem constant byte address 0x4 - core index']
  #allocation1 [shape = 'u32[144,128]{1,0:T(1,128)}', space=vmem, size = 0x12000, scoped, tag = 'internal scratch']
  #allocation2 [shape = 'f32[1]{0:T(128)S(6)}', space=smem, size = 0x200, scoped, tag = 'scoped memory for tpu_custom_call.1']
  %s0 = inlined_call_operand.vmem [shape: f32[8,16], index: 0, kind: input, shape index: {}]
  %s1 = inlined_call_operand.vmem [shape: f32[16,1], index: 1, kind: input, shape index: {}]
  %s2 = inlined_call_operand.<no memory space> [shape: f32[1], index: 2, kind: input, shape index: {}]
  %s3 = inlined_call_operand.hbm [shape: f32[1,8], index: 3, kind: output, shape index: {}]
  %s4 = sld [smem:[#allocation0]]
  $region22: #{tpu_custom_call.1} parent=0
    _
  %s6 = ssub.s32 1, %s4
  %s7 = scalar_select 0, %s6, %s4
  %8 = sst [smem:[#allocation2]] %s2
  $region1: #{tpu_custom_call.1} parent=0
    #allocation3 [shape = 'u8[512]{0}', space=vmem, size = 0x400, scoped, tag = 'output window, operand 0, single buffered']
    #allocation4 [shape = 's32[1]{0}', space=sflag, size = 0x4, scoped, tag = 'scoped memory for tpu_custom_call.1']
    %9 = vsyncpa [#allocation4], 0
    // Predicated region
    $region2: #{tpu_custom_call.1} parent=1 // pred_check
      _
    $region3: #{tpu_custom_call.1} parent=1 // pred_check_branch
      %11 = sbr.rel (0) target = $region5
    $region4: #{tpu_custom_call.1} parent=1 // pred_region
      _
    $region5: #{tpu_custom_call.1} parent=1 // pred_fallthru
      _
    // Predicated region
    $region6: #{tpu_custom_call.1} parent=1 // pred_check
      _
    $region7: #{tpu_custom_call.1} parent=1 // pred_check_branch
      %13 = sbr.rel (0) target = $region9
    $region8: #{tpu_custom_call.1} parent=1 // pred_region
      _
    $region9: #{tpu_custom_call.1} parent=1 // pred_fallthru
      _
    // Predicated region
    $region10: #{tpu_custom_call.1} parent=1 // pred_check
      _
    $region11: #{tpu_custom_call.1} parent=1 // pred_check_branch
      %15 = sbr.rel (0) target = $region13
    $region12: #{tpu_custom_call.1} parent=1 // pred_region
      _
    $region13: #{tpu_custom_call.1} parent=1 // pred_fallthru
      _
    %v16 = vld [vmem:[%s0] sm:$0xff]
    %17 = vxpose.xlu0.b32.start [1/16] %v16, 128
    %18 = vxpose.xlu0.b32.cont [2/16] 0.0, 128
    %19 = vxpose.xlu0.b32.cont [3/16] 0.0, 128
    %20 = vxpose.xlu0.b32.cont [4/16] 0.0, 128
    %21 = vxpose.xlu0.b32.cont [5/16] 0.0, 128
    %22 = vxpose.xlu0.b32.cont [6/16] 0.0, 128
    %23 = vxpose.xlu0.b32.cont [7/16] 0.0, 128
    %24 = vxpose.xlu0.b32.cont [8/16] 0.0, 128
    %25 = vxpose.xlu0.b32.cont [9/16] 0.0, 128
    %26 = vxpose.xlu0.b32.cont [10/16] 0.0, 128
    %27 = vxpose.xlu0.b32.cont [11/16] 0.0, 128
    %28 = vxpose.xlu0.b32.cont [12/16] 0.0, 128
    %29 = vxpose.xlu0.b32.cont [13/16] 0.0, 128
    %30 = vxpose.xlu0.b32.cont [14/16] 0.0, 128
    %31 = vxpose.xlu0.b32.cont [15/16] 0.0, 128
    %32 = vxpose.xlu0.b32.end [16/16] 0.0, 128
    %v33 = vpop.trf.xlu0
    %v34 = vpop.trf.xlu0
    %v35 = vpop.trf.xlu0
    %v36 = vpop.trf.xlu0
    %v37 = vpop.trf.xlu0
    %v38 = vpop.trf.xlu0
    %v39 = vpop.trf.xlu0
    %v40 = vpop.trf.xlu0
    %v41 = vpop.trf.xlu0
    %v42 = vpop.trf.xlu0
    %v43 = vpop.trf.xlu0
    %v44 = vpop.trf.xlu0
    %v45 = vpop.trf.xlu0
    %v46 = vpop.trf.xlu0
    %v47 = vpop.trf.xlu0
    %v48 = vpop.trf.xlu0
    %v49 = vld [vmem:[%s1] sm:$0xff]
    %v50 = vld [vmem:[%s1 + $0x8] sm:$0xff]
    %52 = vset.pattern.permute.xlu0 0
    %53 = vperm.xlu0 %52, %v49
    %v54 = vpop.permute.xlu0 %53
    %57 = vset.pattern.permute.xlu0 0
    %58 = vperm.xlu0 %57, %v50
    %v59 = vpop.permute.xlu0 %58
    %v61 = vmul.f32 %v33, %v54
    %v62 = vmul.f32 %v34, %v59
    %vm63 = vcmask 64512
    %v64 = vsel %vm63, %v61, 0.0
    %v65 = vsel %vm63, %v62, 0.0
    %v66 = vadd.f32 %v64, %v65
    %v67 = vrot.slane %v66, 4
    %v68 = vadd.f32 %v66, %v67
    %v69 = vrot.slane %v68, 2
    %v70 = vadd.f32 %v68, %v69
    %v71 = vrot.slane %v70, 1
    %v72 = vadd.f32 %v70, %v71
    %s73 = sld [smem:[#allocation2]]
    %v74 = vstv %s73
    %v75 = vadd.f32 %v72, %v74
    %vm76 = vcmask 57344
    %77 = vst.msk [vmem:[#allocation3] sm:$0x1] %vm76, %v75
    // Predicated region
    $region14: #{tpu_custom_call.1} parent=1 // pred_check
      _
    $region15: #{tpu_custom_call.1} parent=1 // pred_check_branch
      %79 = sbr.rel (0) target = $region17
    $region16: #{tpu_custom_call.1} parent=1 // pred_region
      %s81 = ssub.s32 16, 16
      %82 = vsyncadd [#allocation4], %s81
      %s84 = sshll.u32 [#allocation3], 4
      %s85 = int_to_ptr.vmem [resolvable:$true] %s84
      %87 = dma.vmem_to_hbm [thread:$0]  %s85, 16, %s3, [#allocation4]
    $region17: #{tpu_custom_call.1} parent=1 // pred_fallthru
      _
    // Predicated region
    $region18: #{tpu_custom_call.1} parent=1 // pred_check
      _
    $region19: #{tpu_custom_call.1} parent=1 // pred_check_branch
      %89 = sbr.rel (0) target = $region21
    $region20: #{tpu_custom_call.1} parent=1 // pred_region
      %90 = dma.done [#allocation4], 16
    $region21: #{tpu_custom_call.1} parent=1 // pred_fallthru
      _
    %91 = vsyncpa [#allocation4], 1

</llo_original>
